<compile_context>
chip_gen: v5e
topology: v5e:2x2
jax: 0.10.0
libtpu: 0.0.40
codegen_flags: <defaults>
</compile_context>

<pallas_src>
import functools
import math

import jax
import jax.numpy as jnp
from jax.experimental import pallas as pl
from jax.experimental.pallas import tpu as pltpu


# ----------------------------- kernel ------------------------------------- #

def _neg_scale_kernel(neg_lambda, g_ref, o_ref):
    # Backward: dx = (-lambda) * upstream_grad.  `neg_lambda` is a Python
    # float (static), folded directly into the VPU multiply.
    o_ref[...] = neg_lambda * g_ref[...]


# ----------------------------- layout helpers ------------------------------ #

def _lane_dense_2d(shape):
    """Pick a (rows, lane) view of the flattened tensor with a lane-dense
    last dim (large multiple of 128) when the element count allows it."""
    n = math.prod(shape)
    for lane in (2048, 1024, 512, 256, 128):
        if n % lane == 0:
            return n // lane, lane
    # Fallback: keep the original trailing dim (block == full array dims,
    # which is always a legal BlockSpec even if not lane-dense).
    lane = shape[-1]
    return n // lane, lane


def _block_rows(rows, lane, itemsize):
    """~2 MiB blocks: big enough to amortize per-step overhead, small enough
    that in+out double-buffers stay far below v7x's default scoped VMEM."""
    target = max(8, (2 * 1024 * 1024) // (lane * itemsize))
    tm = min(rows, target)
    if tm < rows:
        # Keep the sublane dim a multiple of 8 unless the block spans all rows.
        tm = max(8, (tm // 8) * 8)
    return tm


# ----------------------------- pallas wrapper ------------------------------ #

def _neg_scale(g2d, neg_lambda):
    rows, lane = g2d.shape
    itemsize = jnp.dtype(g2d.dtype).itemsize
    tm = _block_rows(rows, lane, itemsize)
    grid = (pl.cdiv(rows, tm),)
    return pl.pallas_call(
        functools.partial(_neg_scale_kernel, neg_lambda),
        out_shape=jax.ShapeDtypeStruct(g2d.shape, g2d.dtype),
        grid=grid,
        in_specs=[pl.BlockSpec((tm, lane), lambda i: (i, 0))],
        out_specs=pl.BlockSpec((tm, lane), lambda i: (i, 0)),
        compiler_params=pltpu.CompilerParams(
            dimension_semantics=("parallel",)),
    )(g2d)


# ----------------------------- custom_vjp op -------------------------------- #

@functools.partial(jax.custom_vjp, nondiff_argnums=(1,))
def gradient_reversal(x, lambda_=1.0):
    # Forward pass is the identity.  (PyTorch clones only to detach storage;
    # JAX arrays are immutable, so returning x is exact and free.)
    return x


def _grl_fwd(x, lambda_):
    return x, None


def _grl_bwd(lambda_, _residual, g):
    neg_lambda = -float(lambda_)
    if g.ndim == 0 or g.size == 0:
        # Degenerate shapes: no point launching a kernel.
        return (neg_lambda * g,)
    orig_shape = g.shape
    rows, lane = _lane_dense_2d(orig_shape)
    g2d = g.reshape(rows, lane)
    dx2d = _neg_scale(g2d, neg_lambda)
    return (dx2d.reshape(orig_shape),)


gradient_reversal.defvjp(_grl_fwd, _grl_bwd)


# ----------------------------- module-style wrapper ------------------------ #

class GradientReversal:
    """JAX/Pallas equivalent of the PyTorch GradientReversal module."""

    def __init__(self, lambda_=1.0):
        self.lambda_ = float(lambda_)

    def __call__(self, x):
        return gradient_reversal(x, self.lambda_)


# ----------------------------- main ---------------------------------------- #

if __name__ == "__main__":
    key = jax.random.PRNGKey(0)
    # Small NCHW input consistent with a conv-style feature map.
    x = jax.random.normal(key, (2, 4, 16, 16), dtype=jnp.float32)

    grl = GradientReversal(lambda_=1.0)

    # Forward (identity).
    y = jax.block_until_ready(grl(x))
    assert y.shape == x.shape and y.dtype == x.dtype
    assert bool(jnp.allclose(y, x))

    # Backward: grad of sum(grl(x)) should be -lambda * ones.
    grads = jax.block_until_ready(jax.grad(lambda z: jnp.sum(grl(z)))(x))
    assert grads.shape == x.shape and grads.dtype == x.dtype
    assert bool(jnp.allclose(grads, -1.0 * jnp.ones_like(x)))

    # Non-unit lambda check.
    grl_half = GradientReversal(lambda_=0.5)
    grads_half = jax.block_until_ready(
        jax.grad(lambda z: jnp.sum(grl_half(z)))(x))
    assert bool(jnp.allclose(grads_half, -0.5 * jnp.ones_like(x)))

    print("KERNEL_OK")
</pallas_src>

<mosaic_0001>
module attributes {stable_mosaic.version = 11 : i64} {
  func.func @_neg_scale_kernel(%arg0: i32, %arg1: memref<1x2048xf32, #tpu.memory_space<vmem>>, %arg2: memref<1x2048xf32, #tpu.memory_space<vmem>>) attributes {dimension_semantics = [#tpu.dimension_semantics<parallel>], iteration_bounds = array<i64: 1>, scalar_prefetch = 0 : i64, scratch_operands = 0 : i64, tpu.core_type = #tpu.core_type<tc>, window_params = [{transform_indices = @transform_0, window_bounds = array<i64: 1, 2048>}, {transform_indices = @transform_1, window_bounds = array<i64: 1, 2048>}]} {
    %c0 = arith.constant 0 : index
    %c0_0 = arith.constant 0 : index
    %0 = vector.load %arg1[%c0, %c0_0] : memref<1x2048xf32, #tpu.memory_space<vmem>>, vector<1x2048xf32>
    %cst = arith.constant -1.000000e+00 : f32
    %1 = vector.broadcast %cst : f32 to vector<1x2048xf32>
    %2 = arith.mulf %1, %0 : vector<1x2048xf32>
    %c0_1 = arith.constant 0 : index
    %c0_2 = arith.constant 0 : index
    %3 = vector.load %arg2[%c0_1, %c0_2] : memref<1x2048xf32, #tpu.memory_space<vmem>>, vector<1x2048xf32>
    tpu.vector_store %arg2[%c0_1, %c0_2], %2 {strides = array<i32>} : memref<1x2048xf32, #tpu.memory_space<vmem>>, vector<1x2048xf32>,
    return
  }
  func.func @transform_0(%arg0: i32) -> (i32, i32) {
    %c0_i32 = arith.constant 0 : i32
    %c0_i32_0 = arith.constant 0 : i32
    return %arg0, %c0_i32 : i32, i32
  }
  func.func @transform_1(%arg0: i32) -> (i32, i32) {
    %c0_i32 = arith.constant 0 : i32
    %c0_i32_0 = arith.constant 0 : i32
    return %arg0, %c0_i32 : i32, i32
  }
}

</mosaic_0001>

<llo_original>
// kernel: tpu_custom_call.1
$region0: #{tpu_custom_call.1}
  #allocation0 [shape = 'u32[]', space=smem, size = 0x4, offset = 0x4, fixed_abs, tag = 'smem constant byte address 0x4 - core index']
  #allocation1 [shape = 'u32[72,128]{1,0:T(1,128)}', space=vmem, size = 0x9000, scoped, tag = 'internal scratch']
  %s0 = inlined_call_operand.hbm [shape: f32[1,2048], index: 0, kind: input, shape index: {}]
  %s1 = inlined_call_operand.hbm [shape: f32[1,2048], index: 1, kind: output, shape index: {}]
  %s2 = sld [smem:[#allocation0]]
  $region18: #{tpu_custom_call.1} parent=0
    _
  %s4 = ssub.s32 1, %s2
  %s5 = scalar_select 0, %s4, %s2
  $region1: #{tpu_custom_call.1} parent=0
    #allocation2 [shape = 'u8[8192]{0}', space=vmem, size = 0x2000, scoped, tag = 'input window, operand 0, single buffered']
    #allocation3 [shape = 's32[1]{0}', space=sflag, size = 0x4, scoped, tag = 'scoped memory for tpu_custom_call.1']
    #allocation4 [shape = 's32[1]{0}', space=sflag, size = 0x4, scoped, tag = 'scoped memory for tpu_custom_call.1']
    #allocation5 [shape = 'u8[8192]{0}', space=vmem, size = 0x2000, scoped, tag = 'output window, operand 0, single buffered']
    %6 = vsyncpa [#allocation3], 0
    %7 = vsyncpa [#allocation4], 0
    // Predicated region
    $region2: #{tpu_custom_call.1} parent=1 // pred_check
      _
    $region3: #{tpu_custom_call.1} parent=1 // pred_check_branch
      %9 = sbr.rel (0) target = $region5
    $region4: #{tpu_custom_call.1} parent=1 // pred_region
      %11 = vsyncadd [#allocation3], 0
      %s13 = sshll.u32 %s0, 4
      %s14 = int_to_ptr.hbm [resolvable:$true] %s13
      %s15 = sshll.u32 [#allocation2], 4
      %s16 = int_to_ptr.vmem [resolvable:$true] %s15
      %18 = dma.hbm_to_vmem [thread:$0]  %s14, 256, %s16, [#allocation3]
    $region5: #{tpu_custom_call.1} parent=1 // pred_fallthru
      _
    // Predicated region
    $region6: #{tpu_custom_call.1} parent=1 // pred_check
      _
    $region7: #{tpu_custom_call.1} parent=1 // pred_check_branch
      %20 = sbr.rel (0) target = $region9
    $region8: #{tpu_custom_call.1} parent=1 // pred_region
      %22 = dma.done [#allocation3], 256
    $region9: #{tpu_custom_call.1} parent=1 // pred_fallthru
      _
    %v23 = vld [vmem:[#allocation2] sm:$0xff]
    %v24 = vld [vmem:[#allocation2 + $0x8] sm:$0xff]
    %v25 = vmul.f32 %v23, -1.0
    %v26 = vmul.f32 %v24, -1.0
    %27 = vst [vmem:[#allocation5] sm:$0xff] %v25
    %28 = vst [vmem:[#allocation5 + $0x8] sm:$0xff] %v26
    // Predicated region
    $region10: #{tpu_custom_call.1} parent=1 // pred_check
      _
    $region11: #{tpu_custom_call.1} parent=1 // pred_check_branch
      %30 = sbr.rel (0) target = $region13
    $region12: #{tpu_custom_call.1} parent=1 // pred_region
      %32 = vsyncadd [#allocation4], 0
      %s34 = sshll.u32 [#allocation5], 4
      %s35 = int_to_ptr.vmem [resolvable:$true] %s34
      %s36 = sshll.u32 %s1, 4
      %s37 = int_to_ptr.hbm [resolvable:$true] %s36
      %39 = dma.vmem_to_hbm [thread:$0]  %s35, 256, %s37, [#allocation4]
    $region13: #{tpu_custom_call.1} parent=1 // pred_fallthru
      _
    // Predicated region
    $region14: #{tpu_custom_call.1} parent=1 // pred_check
      _
    $region15: #{tpu_custom_call.1} parent=1 // pred_check_branch
      %41 = sbr.rel (0) target = $region17
    $region16: #{tpu_custom_call.1} parent=1 // pred_region
      %43 = dma.done [#allocation4], 256
    $region17: #{tpu_custom_call.1} parent=1 // pred_fallthru
      _
    %44 = vsyncpa [#allocation3], 1
    %45 = vsyncpa [#allocation4], 1

</llo_original>
